<compile_context>
chip_gen: v6e
topology: v6e:2x2x1
jax: 0.10.0
libtpu: 0.0.40
codegen_flags: <defaults>
</compile_context>

<pallas_src>
import math

import jax
import jax.numpy as jnp
from jax.experimental import pallas as pl
from jax.experimental.pallas import tpu as pltpu

# Minimum second-to-last block dim per dtype byte width (sublane packing).
_MIN_SUBLANE = {4: 8, 2: 16, 1: 32}

# Target bytes per block (per array): ~6 MiB (roofline knee per perf review).
_TARGET_BLOCK_BYTES = 6 * 1024 * 1024

# Inputs at or below this stay a single full-slab block; larger inputs are
# split into >= _MIN_PIPELINE_BLOCKS blocks so DMA and compute overlap.
_SMALL_SINGLE_BLOCK_BYTES = 1 * 1024 * 1024
_MIN_PIPELINE_BLOCKS = 8

# 3 input buffers + 2 output buffers at 6 MiB = 30 MiB, plus headroom.
# Above every generation's scoped default, below v7x's 64 MiB physical VMEM.
_VMEM_LIMIT_BYTES = 40 * 1024 * 1024

_LANE_CANDIDATES = (4096, 2048, 1024, 512, 256, 128)


def _make_lambda(func):
    """Pallas equivalent of Lambda(func) for elementwise, shape-preserving func."""

    def kernel(x_ref, o_ref):
        # Purely elementwise; vld/vst + HBM DMA are the binding resources,
        # so the body is intentionally minimal.
        o_ref[...] = func(x_ref[...])

    def apply(x: jax.Array) -> jax.Array:
        orig_shape = x.shape
        dtype = x.dtype
        itemsize = jnp.dtype(dtype).itemsize
        sub = _MIN_SUBLANE.get(itemsize, 8)
        total = math.prod(orig_shape)
        total_bytes = total * itemsize

        # Pick the widest lane-dense last dim that divides the element count
        # (pure reshape, no padding copy).
        lane = None
        for cand in _LANE_CANDIDATES:
            if total >= cand and total % cand == 0:
                lane = cand
                break
        if lane is None:
            # TODO(synk): element counts not divisible by 128 fall back to
            # plain XLA; a pad+slice path would add a full extra HBM round trip.
            return func(x)

        rows = total // lane

        if total_bytes <= _SMALL_SINGLE_BLOCK_BYTES or rows < sub:
            # Tiny input: one full-extent block (block_shape == array shape is
            # always legal regardless of (8,128) alignment).
            block_rows = rows
        else:
            # ~_TARGET_BLOCK_BYTES per block ...
            block_rows = max(sub, _TARGET_BLOCK_BYTES // (lane * itemsize))
            # ... but at least _MIN_PIPELINE_BLOCKS blocks so the pipeline
            # actually overlaps read / compute / writeback on medium inputs.
            block_rows = min(block_rows, -(-rows // _MIN_PIPELINE_BLOCKS))
            # Keep it a sublane multiple (lane is already a multiple of 128);
            # the trailing partial block is masked by Pallas.
            block_rows = max(sub, (block_rows // sub) * sub)
            block_rows = min(block_rows, rows)

        num_blocks = -(-rows // block_rows)

        idx_map = lambda i: (i, 0)
        if num_blocks >= 3:
            # Pipeline is pure DMA; a third input buffer hides issue/latency
            # jitter. Output keeps the default double buffer.
            in_spec = pl.BlockSpec((block_rows, lane), idx_map,
                                   pipeline_mode=pl.Buffered(3))
        else:
            in_spec = pl.BlockSpec((block_rows, lane), idx_map)
        out_spec = pl.BlockSpec((block_rows, lane), idx_map)

        x2d = x.reshape(rows, lane)

        out2d = pl.pallas_call(
            kernel,
            out_shape=jax.ShapeDtypeStruct((rows, lane), dtype),
            grid_spec=pltpu.PrefetchScalarGridSpec(
                num_scalar_prefetch=0,
                grid=(num_blocks,),
                in_specs=[in_spec],
                out_specs=out_spec,
            ),
            compiler_params=pltpu.CompilerParams(
                # Blocks are independent.
                dimension_semantics=(pltpu.PARALLEL,),
                vmem_limit_bytes=_VMEM_LIMIT_BYTES,
            ),
            # Elementwise & shape-preserving: the output may reuse the input's
            # HBM buffer (XLA copies defensively if the caller did not donate).
            input_output_aliases={0: 0},
            cost_estimate=pl.CostEstimate(
                flops=total,
                bytes_accessed=2 * total_bytes,
                transcendentals=0,
            ),
        )(x2d)

        return out2d.reshape(orig_shape)

    return apply


# Concrete instantiation matching the common dltools usage: Lambda(F.relu).
# TODO(synk): Lambda accepts arbitrary callables; only elementwise,
# shape-preserving funcs are lowered to the Pallas kernel.
lambda_relu = _make_lambda(lambda v: jnp.maximum(v, 0))


if __name__ == "__main__":
    key = jax.random.PRNGKey(0)

    # Small NCHW input consistent with a conv-style pipeline:
    # batch=2, channels=4, 16x16 spatial -> single full-slab block, grid=(1,).
    x_small = jax.random.normal(key, (2, 4, 16, 16), dtype=jnp.float32)
    ref_small = jax.block_until_ready(jnp.maximum(x_small, 0.0))
    y_small = jax.block_until_ready(lambda_relu(x_small))
    assert y_small.shape == x_small.shape and y_small.dtype == x_small.dtype
    assert bool(jnp.allclose(y_small, ref_small)), (
        "mismatch vs reference relu (small input)")

    # 4 MiB input to exercise the pipelined multi-block path
    # ((32, 4096) blocks, grid=(8,), Buffered(3) inputs).
    x_big = jax.random.normal(key, (8, 32, 64, 64), dtype=jnp.float32)
    ref_big = jax.block_until_ready(jnp.maximum(x_big, 0.0))
    y_big = jax.block_until_ready(lambda_relu(x_big))
    assert y_big.shape == x_big.shape and y_big.dtype == x_big.dtype
    assert bool(jnp.allclose(y_big, ref_big)), (
        "mismatch vs reference relu (tiled input)")

    # Odd row count (rows=300 with block_rows=32) to exercise the masked
    # trailing partial block introduced by dropping the exact-divisor rule.
    x_odd = jax.random.normal(key, (6, 50, 64, 64), dtype=jnp.float32)
    ref_odd = jax.block_until_ready(jnp.maximum(x_odd, 0.0))
    y_odd = jax.block_until_ready(lambda_relu(x_odd))
    assert y_odd.shape == x_odd.shape and y_odd.dtype == x_odd.dtype
    assert bool(jnp.allclose(y_odd, ref_odd)), (
        "mismatch vs reference relu (partial trailing block)")

    print("KERNEL_OK")
</pallas_src>

<mosaic_0001>
module attributes {stable_mosaic.version = 11 : i64} {
  func.func @kernel(%arg0: i32, %arg1: memref<1x2048xf32, #tpu.memory_space<vmem>>, %arg2: memref<1x2048xf32, #tpu.memory_space<vmem>>) attributes {dimension_semantics = [#tpu.dimension_semantics<parallel>], iteration_bounds = array<i64: 1>, scalar_prefetch = 0 : i64, scratch_operands = 0 : i64, tpu.core_type = #tpu.core_type<tc>, window_params = [{transform_indices = @transform_0, window_bounds = array<i64: 1, 2048>}, {transform_indices = @transform_1, window_bounds = array<i64: 1, 2048>}]} {
    %c0 = arith.constant 0 : index
    %c0_0 = arith.constant 0 : index
    %0 = vector.load %arg1[%c0, %c0_0] : memref<1x2048xf32, #tpu.memory_space<vmem>>, vector<1x2048xf32>
    %cst = arith.constant 0.000000e+00 : f32
    %1 = vector.broadcast %cst : f32 to vector<1x2048xf32>
    %2 = arith.maximumf %0, %1 : vector<1x2048xf32>
    %c0_1 = arith.constant 0 : index
    %c0_2 = arith.constant 0 : index
    %3 = vector.load %arg2[%c0_1, %c0_2] : memref<1x2048xf32, #tpu.memory_space<vmem>>, vector<1x2048xf32>
    tpu.vector_store %arg2[%c0_1, %c0_2], %2 {strides = array<i32>} : memref<1x2048xf32, #tpu.memory_space<vmem>>, vector<1x2048xf32>,
    return
  }
  func.func @transform_0(%arg0: i32) -> (i32, i32) {
    %c0_i32 = arith.constant 0 : i32
    %c0_i32_0 = arith.constant 0 : i32
    return %arg0, %c0_i32 : i32, i32
  }
  func.func @transform_1(%arg0: i32) -> (i32, i32) {
    %c0_i32 = arith.constant 0 : i32
    %c0_i32_0 = arith.constant 0 : i32
    return %arg0, %c0_i32 : i32, i32
  }
}

</mosaic_0001>

<llo_original>
// kernel: tpu_custom_call.1
$region0: #{tpu_custom_call.1}
  #allocation0 [shape = 'u32[]', space=smem, size = 0x4, offset = 0x4, fixed_abs, tag = 'smem constant byte address 0x4 - core index']
  #allocation1 [shape = 'u32[144,128]{1,0:T(1,128)}', space=vmem, size = 0x12000, scoped, tag = 'internal scratch']
  %s0 = inlined_call_operand.hbm [shape: f32[1,2048], index: 0, kind: input, shape index: {}, may-alias: {0,1}]
  %s1 = inlined_call_operand.hbm [shape: f32[1,2048], index: 1, kind: output, shape index: {}, may-alias: {0,1}]
  %s2 = sld [smem:[#allocation0]]
  $region18: #{tpu_custom_call.1} parent=0
    _
  %s4 = ssub.s32 1, %s2
  %s5 = scalar_select 0, %s4, %s2
  $region1: #{tpu_custom_call.1} parent=0
    #allocation2 [shape = 'u8[8192]{0}', space=vmem, size = 0x2000, scoped, tag = 'input window, operand 0, single buffered']
    #allocation3 [shape = 's32[1]{0}', space=sflag, size = 0x4, scoped, tag = 'scoped memory for tpu_custom_call.1']
    #allocation4 [shape = 's32[1]{0}', space=sflag, size = 0x4, scoped, tag = 'scoped memory for tpu_custom_call.1']
    #allocation5 [shape = 'u8[8192]{0}', space=vmem, size = 0x2000, scoped, tag = 'output window, operand 0, single buffered']
    %6 = vsyncpa [#allocation3], 0
    %7 = vsyncpa [#allocation4], 0
    // Predicated region
    $region2: #{tpu_custom_call.1} parent=1 // pred_check
      _
    $region3: #{tpu_custom_call.1} parent=1 // pred_check_branch
      %9 = sbr.rel (0) target = $region5
    $region4: #{tpu_custom_call.1} parent=1 // pred_region
      %s11 = ssub.s32 256, 256
      %12 = vsyncadd [#allocation3], %s11
      %s14 = sshll.u32 [#allocation2], 4
      %s15 = int_to_ptr.vmem [resolvable:$true] %s14
      %17 = dma.hbm_to_vmem [thread:$0]  %s0, 256, %s15, [#allocation3]
    $region5: #{tpu_custom_call.1} parent=1 // pred_fallthru
      _
    // Predicated region
    $region6: #{tpu_custom_call.1} parent=1 // pred_check
      _
    $region7: #{tpu_custom_call.1} parent=1 // pred_check_branch
      %19 = sbr.rel (0) target = $region9
    $region8: #{tpu_custom_call.1} parent=1 // pred_region
      %20 = dma.done [#allocation3], 256
    $region9: #{tpu_custom_call.1} parent=1 // pred_fallthru
      _
    %v21 = vld [vmem:[#allocation2] sm:$0xff]
    %v22 = vld [vmem:[#allocation2 + $0x8] sm:$0xff]
    %v23 = vmax.f32 %v21, 0.0
    %v24 = vmax.f32 %v22, 0.0
    %25 = vst [vmem:[#allocation5] sm:$0xff] %v23
    %26 = vst [vmem:[#allocation5 + $0x8] sm:$0xff] %v24
    // Predicated region
    $region10: #{tpu_custom_call.1} parent=1 // pred_check
      _
    $region11: #{tpu_custom_call.1} parent=1 // pred_check_branch
      %28 = sbr.rel (0) target = $region13
    $region12: #{tpu_custom_call.1} parent=1 // pred_region
      %s30 = ssub.s32 256, 256
      %31 = vsyncadd [#allocation4], %s30
      %s33 = sshll.u32 [#allocation5], 4
      %s34 = int_to_ptr.vmem [resolvable:$true] %s33
      %36 = dma.vmem_to_hbm [thread:$0]  %s34, 256, %s1, [#allocation4]
    $region13: #{tpu_custom_call.1} parent=1 // pred_fallthru
      _
    // Predicated region
    $region14: #{tpu_custom_call.1} parent=1 // pred_check
      _
    $region15: #{tpu_custom_call.1} parent=1 // pred_check_branch
      %38 = sbr.rel (0) target = $region17
    $region16: #{tpu_custom_call.1} parent=1 // pred_region
      %39 = dma.done [#allocation4], 256
    $region17: #{tpu_custom_call.1} parent=1 // pred_fallthru
      _
    %40 = vsyncpa [#allocation3], 1
    %41 = vsyncpa [#allocation4], 1

</llo_original>
